<compile_context>
chip_gen: v6e
topology: v6e:2x2x1
jax: 0.10.0
libtpu: 0.0.40
codegen_flags: <defaults>
</compile_context>

<pallas_src>
import functools

import jax
import jax.numpy as jnp
from jax.experimental import pallas as pl
from jax.experimental.pallas import tpu as pltpu


def _layernorm_kernel(x_ref, params_ref, o_ref, *, eps):
    # NOTE: rows of the padded partial last block compute garbage statistics, but
    # every op here is row-wise and the writeback clips to the real rows, so the
    # result is unaffected (documented per review's correctness concern).
    x = x_ref[...].astype(jnp.float32)                    # (row_tile, E)
    mean = jnp.mean(x, axis=-1, keepdims=True)            # XLU reduction
    xc = x - mean
    var = jnp.mean(xc * xc, axis=-1, keepdims=True)       # stable two-pass variance
    inv = jax.lax.rsqrt(var + eps)                        # EUP (free slot)
    params = params_ref[...]                              # (2, E) f32, constant block
    scale = params[0:1, :]
    shift = params[1:2, :]
    o_ref[...] = (xc * inv * scale + shift).astype(o_ref.dtype)


def _round_up(x, m):
    return ((x + m - 1) // m) * m


def _vmem_budget_and_limit():
    """Derive (tile-sizing budget, vmem_limit_bytes) from the chip's VMEM size."""
    try:
        vmem_cap = int(pltpu.get_tpu_info().vmem_capacity_bytes)
    except Exception:
        vmem_cap = 64 << 20        # conservative fallback: v7x per-TensorCore VMEM
    # Leave headroom under physical VMEM: 48 MiB on v7x, 96 MiB on v5e/v6e.
    vmem_limit = min((vmem_cap * 3) // 4, 96 << 20)
    budget = vmem_limit // 2       # working-set budget used for tile sizing
    return budget, vmem_limit


def _pick_row_tile(rows, emb, in_dtype, vmem_budget_bytes, *,
                   target_block_bytes=4 << 20, min_grid_steps=4):
    """Rows per grid step, sized from bytes (mem-bound), not from a row count."""
    in_bytes = jnp.dtype(in_dtype).itemsize
    sub = max(8, 32 // max(in_bytes, 1))   # sublane packing: 8 f32, 16 bf16, 32 i8
    # Target ~4 MiB x-blocks so per-grid-step overhead / DMA setup amortizes.
    tile = max(sub, target_block_bytes // max(emb * in_bytes, 1))
    # VMEM working set per row per step: double-buffered input + output tiles
    # (2 bufs each) plus ~4 live f32 tile-sized temporaries in the body.
    per_row = emb * (2 * 2 * in_bytes + 4 * 4)
    tile = min(tile, max(sub, vmem_budget_bytes // max(per_row, 1)))
    # Keep >= min_grid_steps grid steps when rows allow: restores DMA/compute
    # overlap and lets the "parallel" axis shard across v7x's two TensorCores.
    tile = min(tile, _round_up(pl.cdiv(rows, min_grid_steps), sub))
    tile = max(sub, (tile // sub) * sub)
    if tile >= rows:
        return rows   # single full block: block dim == array dim is always legal
    return tile


def layer_norm(x, scale, shift, *, eps=1e-5, row_tile=None):
    """LayerNorm over the last axis of x, matching the PyTorch module's forward."""
    orig_shape = x.shape
    emb = orig_shape[-1]
    rows = 1
    for d in orig_shape[:-1]:
        rows *= d
    rows = max(rows, 1)
    x2 = x.reshape(rows, emb)
    # Pack the affine params into one (2, E) f32 array: a single constant-index
    # block -> one DMA stream/buffer, and the f32 cast is hoisted out of the loop.
    params = jnp.stack(
        [scale.reshape(emb).astype(jnp.float32),
         shift.reshape(emb).astype(jnp.float32)], axis=0)

    vmem_budget, vmem_limit = _vmem_budget_and_limit()
    if row_tile is None:
        row_tile = _pick_row_tile(rows, emb, x.dtype, vmem_budget)
    row_tile = min(row_tile, rows)

    # TODO(synk): for E < 128 (like the demo's 32) stores are masked (vst.msk) and
    # 3/4 of each vreg's lanes idle; for production keep E % 128 == 0, or fold
    # 128/E rows into the lane dim (requires in-kernel segmented reductions).
    grid = (pl.cdiv(rows, row_tile),)
    out = pl.pallas_call(
        functools.partial(_layernorm_kernel, eps=eps),
        out_shape=jax.ShapeDtypeStruct((rows, emb), x.dtype),
        grid_spec=pl.GridSpec(
            grid=grid,
            in_specs=[
                pl.BlockSpec((row_tile, emb), lambda i: (i, 0)),
                pl.BlockSpec((2, emb), lambda i: (0, 0)),
            ],
            out_specs=pl.BlockSpec((row_tile, emb), lambda i: (i, 0)),
        ),
        compiler_params=pltpu.CompilerParams(
            dimension_semantics=("parallel",),
            vmem_limit_bytes=int(vmem_limit),
        ),
    )(x2, params)
    return out.reshape(orig_shape)


if __name__ == "__main__":
    key = jax.random.PRNGKey(0)
    B, S, E = 2, 8, 32
    x = jax.random.normal(key, (B, S, E), dtype=jnp.float32)

    # Parameters initialized as in the PyTorch module's __init__.
    scale = jnp.ones((E,), dtype=jnp.float32)
    shift = jnp.zeros((E,), dtype=jnp.float32)

    out = layer_norm(x, scale, shift)
    out = jax.block_until_ready(out)

    # Reference check (plain JAX), biased variance like unbiased=False.
    mean = jnp.mean(x, axis=-1, keepdims=True)
    var = jnp.mean((x - mean) ** 2, axis=-1, keepdims=True)
    ref = (x - mean) / jnp.sqrt(var + 1e-5) * scale + shift
    assert jnp.allclose(out, ref, atol=1e-5, rtol=1e-5), "mismatch vs reference"

    print("KERNEL_OK")
</pallas_src>

<mosaic_0001>
module attributes {stable_mosaic.version = 11 : i64} {
  func.func @_layernorm_kernel(%arg0: i32, %arg1: memref<8x32xf32, #tpu.memory_space<vmem>>, %arg2: memref<2x32xf32, #tpu.memory_space<vmem>>, %arg3: memref<8x32xf32, #tpu.memory_space<vmem>>) attributes {dimension_semantics = [#tpu.dimension_semantics<parallel>], iteration_bounds = array<i64: 2>, scalar_prefetch = 0 : i64, scratch_operands = 0 : i64, tpu.core_type = #tpu.core_type<tc>, window_params = [{transform_indices = @transform_0, window_bounds = array<i64: 8, 32>}, {pipeline_mode = #tpu.pipeline_mode<synchronous>, transform_indices = @transform_1, window_bounds = array<i64: 2, 32>}, {transform_indices = @transform_2, window_bounds = array<i64: 8, 32>}]} {
    %c0 = arith.constant 0 : index
    %c0_0 = arith.constant 0 : index
    %0 = vector.load %arg1[%c0, %c0_0] : memref<8x32xf32, #tpu.memory_space<vmem>>, vector<8x32xf32>
    %cst = arith.constant dense<0.000000e+00> : vector<8xf32>
    %1 = vector.multi_reduction <add>, %0, %cst [1] : vector<8x32xf32> to vector<8xf32>
    %2 = vector.shape_cast %1 : vector<8xf32> to vector<8x1xf32>
    %cst_1 = arith.constant 3.200000e+01 : f32
    %3 = vector.broadcast %cst_1 : f32 to vector<8x1xf32>
    %4 = arith.divf %2, %3 : vector<8x1xf32>
    %5 = vector.broadcast %4 : vector<8x1xf32> to vector<8x32xf32>
    %6 = arith.subf %0, %5 : vector<8x32xf32>
    %7 = arith.mulf %6, %6 : vector<8x32xf32>
    %cst_2 = arith.constant dense<0.000000e+00> : vector<8xf32>
    %8 = vector.multi_reduction <add>, %7, %cst_2 [1] : vector<8x32xf32> to vector<8xf32>
    %9 = vector.shape_cast %8 : vector<8xf32> to vector<8x1xf32>
    %cst_3 = arith.constant 3.200000e+01 : f32
    %10 = vector.broadcast %cst_3 : f32 to vector<8x1xf32>
    %11 = arith.divf %9, %10 : vector<8x1xf32>
    %cst_4 = arith.constant 9.99999974E-6 : f32
    %12 = vector.broadcast %cst_4 : f32 to vector<8x1xf32>
    %13 = arith.addf %11, %12 : vector<8x1xf32>
    %14 = math.rsqrt %13 : vector<8x1xf32>
    %c0_5 = arith.constant 0 : index
    %c0_6 = arith.constant 0 : index
    %15 = vector.load %arg2[%c0_5, %c0_6] : memref<2x32xf32, #tpu.memory_space<vmem>>, vector<2x32xf32>
    %16 = vector.extract_strided_slice %15 {offsets = [0, 0], sizes = [1, 32], strides = [1, 1]} : vector<2x32xf32> to vector<1x32xf32>
    %17 = vector.extract_strided_slice %15 {offsets = [1, 0], sizes = [1, 32], strides = [1, 1]} : vector<2x32xf32> to vector<1x32xf32>
    %18 = vector.broadcast %14 : vector<8x1xf32> to vector<8x32xf32>
    %19 = arith.mulf %6, %18 : vector<8x32xf32>
    %20 = vector.broadcast %16 : vector<1x32xf32> to vector<8x32xf32>
    %21 = arith.mulf %19, %20 : vector<8x32xf32>
    %22 = vector.broadcast %17 : vector<1x32xf32> to vector<8x32xf32>
    %23 = arith.addf %21, %22 : vector<8x32xf32>
    %c0_7 = arith.constant 0 : index
    %c0_8 = arith.constant 0 : index
    %24 = vector.load %arg3[%c0_7, %c0_8] : memref<8x32xf32, #tpu.memory_space<vmem>>, vector<8x32xf32>
    tpu.vector_store %arg3[%c0_7, %c0_8], %23 {strides = array<i32>} : memref<8x32xf32, #tpu.memory_space<vmem>>, vector<8x32xf32>,
    return
  }
  func.func @transform_0(%arg0: i32) -> (i32, i32) {
    %c0_i32 = arith.constant 0 : i32
    %c0_i32_0 = arith.constant 0 : i32
    return %arg0, %c0_i32 : i32, i32
  }
  func.func @transform_1(%arg0: i32) -> (i32, i32) {
    %c0_i32 = arith.constant 0 : i32
    %c0_i32_0 = arith.constant 0 : i32
    %c0_i32_1 = arith.constant 0 : i32
    return %c0_i32, %c0_i32_0 : i32, i32
  }
  func.func @transform_2(%arg0: i32) -> (i32, i32) {
    %c0_i32 = arith.constant 0 : i32
    %c0_i32_0 = arith.constant 0 : i32
    return %arg0, %c0_i32 : i32, i32
  }
}

</mosaic_0001>

<llo_original>
// kernel: tpu_custom_call.1
$region0: #{tpu_custom_call.1}
  #allocation0 [shape = 'u32[]', space=smem, size = 0x4, offset = 0x4, fixed_abs, tag = 'smem constant byte address 0x4 - core index']
  #allocation1 [shape = 'u32[144,128]{1,0:T(1,128)}', space=vmem, size = 0x12000, scoped, tag = 'internal scratch']
  %s0 = inlined_call_operand.hbm [shape: f32[16,32], index: 0, kind: input, shape index: {}]
  %s1 = inlined_call_operand.hbm [shape: f32[2,32], index: 1, kind: input, shape index: {}]
  %s2 = inlined_call_operand.hbm [shape: f32[16,32], index: 2, kind: output, shape index: {}]
  %s3 = sld [smem:[#allocation0]]
  $region49: #{tpu_custom_call.1} parent=0
    _
  %s5 = ssub.s32 1, %s3
  %s6 = scalar_select 0, %s5, %s3
  $region1: #{tpu_custom_call.1} parent=0
    #allocation2 [shape = 'u8[8192]{0}', space=vmem, size = 0x2000, scoped, tag = 'input window, operand 0']
    #allocation3 [shape = 's32[2]{0}', space=sflag, size = 0x8, scoped, tag = 'scoped memory for tpu_custom_call.1']
    #allocation4 [shape = 's32[2]{0}', space=sflag, size = 0x8, scoped, tag = 'scoped memory for tpu_custom_call.1']
    #allocation5 [shape = 'u8[1024]{0}', space=vmem, size = 0x400, scoped, tag = 'input window, operand 1, single buffered']
    #allocation6 [shape = 's32[1]{0}', space=sflag, size = 0x4, scoped, tag = 'scoped memory for tpu_custom_call.1']
    #allocation7 [shape = 'u8[8192]{0}', space=vmem, size = 0x2000, scoped, tag = 'output window, operand 0']
    %7 = vsyncpa [#allocation3], 0
    %s8 = scalar_lea.sflag [#allocation3], 1
    %9 = vsyncpa %s8, 0
    %10 = vsyncpa [#allocation6], 0
    %11 = vsyncpa [#allocation4], 0
    %s12 = scalar_lea.sflag [#allocation4], 1
    %13 = vsyncpa %s12, 0
    loop: start=0, step=1, limit=4
    $region2: #{tpu_custom_call.1} parent=1 // loop_pre_header
      _
    $region3: #{tpu_custom_call.1} parent=1 // loop_header
      %s15 = sphi 0, %s19
      %p16 = scmp.ge.s32.totalorder %s15, 4
      %s25 = sphi 0, %s27
      %s28 = sphi 0, %s25
      %s29 = sphi 0, %s28
      %s45 = sphi 0, %s29
      %s49 = sphi 0, %s49
      %s51 = sphi 0, %s49
      %s52 = sphi 0, %s51
      %s66 = sphi 0, %s52
      %s72 = sphi 0, %s74
      %s75 = sphi 0, %s72
      %s76 = sphi 0, %s75
      %s92 = sphi 0, %s76
    $region4: #{tpu_custom_call.1} parent=1 // loop_header_branch
      %18 = sbr.rel (%p16) target = $region8
    $region5: #{tpu_custom_call.1} parent=1 // loop_body
      %s20 = ssub.s32 %s15, 1
      %s21 = ssub.s32 %s15, 2
      %s22 = sadd.s32 %s15, 1
      %s23 = ssub.s32 %s15, %s22
      %p24 = scmp.eq.s32.totalorder %s23, 0
      %s26 = sadd.s32 %s25, 1
      %s27 = scalar_select %p24, %s25, %s26
      %p30 = pneg %p24
      %p31 = scmp.eq.s32.totalorder %s15, 1
      %p32 = por %p30, %p31
      %p33 = scmp.ne.s32.totalorder %s25, %s28
      %p34 = scmp.eq.s32.totalorder %s15, 0
      %p35 = por %p33, %p34
      %p36 = scmp.ne.s32.totalorder %s25, %s28
      %p37 = scmp.eq.s32.totalorder %s20, 1
      %p38 = por %p36, %p37
      %p39 = scmp.ne.s32.totalorder %s28, %s29
      %p40 = scmp.eq.s32.totalorder %s20, 0
      %p41 = por %p39, %p40
      %p42 = scmp.ne.s32.totalorder %s28, %s29
      %p43 = scmp.eq.s32.totalorder %s21, 1
      %p44 = por %p42, %p43
      %p46 = scmp.ne.s32.totalorder %s29, %s45
      %p47 = scmp.eq.s32.totalorder %s21, 0
      %p48 = por %p46, %p47
      %s50 = sadd.s32 %s49, 1
      %p53 = scmp.eq.s32.totalorder %s15, 1
      %p54 = scmp.ne.s32.totalorder %s49, %s51
      %p55 = scmp.eq.s32.totalorder %s15, 0
      %p56 = por %p54, %p55
      %p57 = scmp.ne.s32.totalorder %s49, %s51
      %p58 = scmp.eq.s32.totalorder %s20, 1
      %p59 = por %p57, %p58
      %p60 = scmp.ne.s32.totalorder %s51, %s52
      %p61 = scmp.eq.s32.totalorder %s20, 0
      %p62 = por %p60, %p61
      %p63 = scmp.ne.s32.totalorder %s51, %s52
      %p64 = scmp.eq.s32.totalorder %s21, 1
      %p65 = por %p63, %p64
      %p67 = scmp.ne.s32.totalorder %s52, %s66
      %p68 = scmp.eq.s32.totalorder %s21, 0
      %p69 = por %p67, %p68
      %s70 = ssub.s32 %s15, %s22
      %p71 = scmp.eq.s32.totalorder %s70, 0
      %s73 = sadd.s32 %s72, 1
      %s74 = scalar_select %p71, %s72, %s73
      %p77 = pneg %p71
      %p78 = scmp.eq.s32.totalorder %s15, 1
      %p79 = por %p77, %p78
      %p80 = scmp.ne.s32.totalorder %s72, %s75
      %p81 = scmp.eq.s32.totalorder %s15, 0
      %p82 = por %p80, %p81
      %p83 = scmp.ne.s32.totalorder %s72, %s75
      %p84 = scmp.eq.s32.totalorder %s20, 1
      %p85 = por %p83, %p84
      %p86 = scmp.ne.s32.totalorder %s75, %s76
      %p87 = scmp.eq.s32.totalorder %s20, 0
      %p88 = por %p86, %p87
      %p89 = scmp.ne.s32.totalorder %s75, %s76
      %p90 = scmp.eq.s32.totalorder %s21, 1
      %p91 = por %p89, %p90
      %p93 = scmp.ne.s32.totalorder %s76, %s92
      %p94 = scmp.eq.s32.totalorder %s21, 0
      %p95 = por %p93, %p94
      %p96 = scmp.le.s32.totalorder 1, %s15
      %p97 = scmp.lt.s32.totalorder %s15, 3
      %p98 = pnand %p96, %p97
      %p99 = pneg %p98
      // Predicated region
      $region9: #{tpu_custom_call.1} parent=5 // pred_check
        _
      $region10: #{tpu_custom_call.1} parent=5 // pred_check_branch
        %101 = sbr.rel (%p98) target = $region12
      $region11: #{tpu_custom_call.1} parent=5 // pred_region
        %s102 = ssub.s32 %s15, 1
        // Predicated region
        $region13: #{tpu_custom_call.1} parent=11 // pred_check
          %p103 = pneg %p62
        $region14: #{tpu_custom_call.1} parent=11 // pred_check_branch
          %105 = sbr.rel (%p103) target = $region16
        $region15: #{tpu_custom_call.1} parent=11 // pred_region
          %s107 = ssub.s32 32, 32
          %108 = vsyncadd [#allocation6], %s107
          %s110 = sshll.u32 [#allocation5], 4
          %s111 = int_to_ptr.vmem [resolvable:$true] %s110
          %113 = dma.hbm_to_vmem [thread:$0]  %s1, 32, %s111, [#allocation6]
        $region16: #{tpu_custom_call.1} parent=11 // pred_fallthru
          _
      $region12: #{tpu_custom_call.1} parent=5 // pred_fallthru
        _
      %p114 = scmp.lt.s32.totalorder %s15, 2
      // Predicated region
      $region17: #{tpu_custom_call.1} parent=5 // pred_check
        %p115 = pneg %p114
      $region18: #{tpu_custom_call.1} parent=5 // pred_check_branch
        %117 = sbr.rel (%p115) target = $region20
      $region19: #{tpu_custom_call.1} parent=5 // pred_region
        // Predicated region
        $region21: #{tpu_custom_call.1} parent=19 // pred_check
          %p118 = pneg %p35
        $region22: #{tpu_custom_call.1} parent=19 // pred_check_branch
          %120 = sbr.rel (%p118) target = $region24
        $region23: #{tpu_custom_call.1} parent=19 // pred_region
          %s121 = sand.u32 %s25, 1
          %s122 = scalar_lea.sflag [#allocation3], %s121
          %s123 = sand.u32 %s25, 1
          %s124 = smul.addr %s123, 8
          %s125 = scalar_lea.vmem [#allocation2], %s124
          %s127 = ssub.s32 128, 128
          %128 = vsyncadd %s122, %s127
          %s129 = smul.addr %s15, 128
          %s130 = scalar_lea.hbm %s0, %s129
          %s132 = sshll.u32 %s125, 4
          %s133 = int_to_ptr.vmem [resolvable:$true] %s132
          %135 = dma.hbm_to_vmem [thread:$0]  %s130, 128, %s133, %s122
        $region24: #{tpu_custom_call.1} parent=19 // pred_fallthru
          _
      $region20: #{tpu_custom_call.1} parent=5 // pred_fallthru
        _
      %p136 = scmp.le.s32.totalorder 1, %s15
      %p137 = scmp.lt.s32.totalorder %s15, 3
      %p138 = pnand %p136, %p137
      %p139 = pneg %p138
      // Predicated region
      $region25: #{tpu_custom_call.1} parent=5 // pred_check
        _
      $region26: #{tpu_custom_call.1} parent=5 // pred_check_branch
        %141 = sbr.rel (%p138) target = $region28
      $region27: #{tpu_custom_call.1} parent=5 // pred_region
        %s142 = ssub.s32 %s15, 1
        %s143 = sand.u32 %s28, 1
        %s144 = scalar_lea.sflag [#allocation3], %s143
        %s145 = sand.u32 %s28, 1
        %s146 = smul.addr %s145, 8
        %s147 = scalar_lea.vmem [#allocation2], %s146
        // Predicated region
        $region29: #{tpu_custom_call.1} parent=27 // pred_check
          %p148 = pneg %p41
        $region30: #{tpu_custom_call.1} parent=27 // pred_check_branch
          %150 = sbr.rel (%p148) target = $region32
        $region31: #{tpu_custom_call.1} parent=27 // pred_region
          %151 = dma.done %s144, 128
        $region32: #{tpu_custom_call.1} parent=27 // pred_fallthru
          _
        // Predicated region
        $region33: #{tpu_custom_call.1} parent=27 // pred_check
          %p152 = pneg %p62
        $region34: #{tpu_custom_call.1} parent=27 // pred_check_branch
          %154 = sbr.rel (%p152) target = $region36
        $region35: #{tpu_custom_call.1} parent=27 // pred_region
          %155 = dma.done [#allocation6], 32
        $region36: #{tpu_custom_call.1} parent=27 // pred_fallthru
          _
        %s156 = sand.u32 %s28, 1
        %s157 = scalar_lea.sflag [#allocation3], %s156
        %s158 = sand.u32 %s28, 1
        %s159 = smul.addr %s158, 8
        %s160 = scalar_lea.vmem [#allocation2], %s159
        %p161 = pneg %p41
        %p162 = pneg %p38
        %p163 = pneg %p62
        %p164 = pneg %p59
        %p165 = pneg %p88
        %p166 = pneg %p85
        %s167 = sand.u32 %s75, 1
        %s168 = scalar_lea.sflag [#allocation4], %s167
        %s169 = sand.u32 %s75, 1
        %s170 = smul.addr %s169, 8
        %s171 = scalar_lea.vmem [#allocation7], %s170
        %v172 = vld [vmem:[%s147] sm:$0xff]
        %vm173 = vcmask 261120
        %v174 = vsel %vm173, %v172, 0.0
        %175 = vadd.xlane.f32.xlu0 %v174
        %v176 = vpop.xlane.xlu0 %175
        %v177 = vrcp.pop 32.0
        %v178 = vmul.f32 %v176, %v177
        %v179 = vsub.f32 %v172, %v178
        %v180 = vmul.f32 %v179, %v179
        %v181 = vsel %vm173, %v180, 0.0
        %182 = vadd.xlane.f32.xlu0 %v181
        %v183 = vpop.xlane.xlu0 %182
        %v184 = vmul.f32 %v183, %v177
        %v185 = vadd.f32 %v184, 1e-05
        %v186 = vrsqrt.pop %v185
        %v187 = vld [vmem:[#allocation5] sm:$0x3]
        %v188 = vmul.f32 %v179, %v186
        %v189 = vlaneseq
        %v190 = vshrl.u32 %v189, 7
        %v191 = vsub.s32 0, %v190
        %v192 = vrot.slane %v187, %v191
        %v193 = vmul.f32 %v188, %v192
        %v194 = vlaneseq
        %v195 = vshrl.u32 %v194, 7
        %v196 = vsub.s32 1, %v195
        %v197 = vrot.slane %v187, %v196
        %v198 = vadd.f32 %v193, %v197
        %199 = vst.msk [vmem:[%s171] sm:$0xff] %vm173, %v198
        %s200 = sand.u32 %s75, 1
        %s201 = scalar_lea.sflag [#allocation4], %s200
        %s202 = sand.u32 %s75, 1
        %s203 = smul.addr %s202, 8
        %s204 = scalar_lea.vmem [#allocation7], %s203
        // Predicated region
        $region37: #{tpu_custom_call.1} parent=27 // pred_check
          %p205 = pneg %p85
        $region38: #{tpu_custom_call.1} parent=27 // pred_check_branch
          %207 = sbr.rel (%p205) target = $region40
        $region39: #{tpu_custom_call.1} parent=27 // pred_region
          %s209 = ssub.s32 128, 128
          %210 = vsyncadd %s201, %s209
          %s211 = smul.addr %s20, 128
          %s212 = scalar_lea.hbm %s2, %s211
          %s214 = sshll.u32 %s204, 4
          %s215 = int_to_ptr.vmem [resolvable:$true] %s214
          %217 = dma.vmem_to_hbm [thread:$0]  %s215, 128, %s212, %s201
        $region40: #{tpu_custom_call.1} parent=27 // pred_fallthru
          _
      $region28: #{tpu_custom_call.1} parent=5 // pred_fallthru
        _
      %p218 = scmp.le.s32.totalorder 2, %s15
      // Predicated region
      $region41: #{tpu_custom_call.1} parent=5 // pred_check
        %p219 = pneg %p218
      $region42: #{tpu_custom_call.1} parent=5 // pred_check_branch
        %221 = sbr.rel (%p219) target = $region44
      $region43: #{tpu_custom_call.1} parent=5 // pred_region
        %s222 = ssub.s32 %s15, 2
        // Predicated region
        $region45: #{tpu_custom_call.1} parent=43 // pred_check
          %p223 = pneg %p91
        $region46: #{tpu_custom_call.1} parent=43 // pred_check_branch
          %225 = sbr.rel (%p223) target = $region48
        $region47: #{tpu_custom_call.1} parent=43 // pred_region
          %s226 = sand.u32 %s76, 1
          %s227 = scalar_lea.sflag [#allocation4], %s226
          %s228 = sand.u32 %s76, 1
          %s229 = smul.addr %s228, 8
          %s230 = scalar_lea.vmem [#allocation7], %s229
          %231 = dma.done %s227, 128
        $region48: #{tpu_custom_call.1} parent=43 // pred_fallthru
          _
      $region44: #{tpu_custom_call.1} parent=5 // pred_fallthru
        _
    $region6: #{tpu_custom_call.1} parent=1 // loop_footer
      %s19 = sadd.s32 1, %s15
    $region7: #{tpu_custom_call.1} parent=1 // loop_footer_branch
      %14 = sbr.rel target = $region3
    $region8: #{tpu_custom_call.1} parent=1 // loop_exit
      _
    %232 = vsyncpa [#allocation3], 1
    %s233 = scalar_lea.sflag [#allocation3], 1
    %234 = vsyncpa %s233, 1
    %235 = vsyncpa [#allocation6], 1
    %236 = vsyncpa [#allocation4], 1
    %s237 = scalar_lea.sflag [#allocation4], 1
    %238 = vsyncpa %s237, 1

</llo_original>
